<compile_context>
chip_gen: v5e
topology: v5e:2x2
jax: 0.10.0
libtpu: 0.0.40
codegen_flags: <defaults>
</compile_context>

<pallas_src>
import jax
import jax.numpy as jnp
from jax.experimental import pallas as pl
from jax.experimental.pallas import tpu as pltpu


_MAX_LANES = 4096            # lane-axis block width cap (multiple of 128)
_MAX_BLOCK_BYTES = 8 << 20   # ~8 MiB / block -> ~32 MiB live with in+out double buffering


def _largest_divisor(total: int, align: int, cap: int) -> int:
    """Largest multiple of `align` that divides `total` and is <= cap.

    Returns `total` itself if total <= cap (full-dim block, always legal).
    Returns 0 if no aligned divisor <= cap exists.
    """
    if total <= cap:
        return total
    t = (cap // align) * align
    while t >= align:
        if total % t == 0:
            return t
        t -= align
    return 0


def _pick_rows_lanes(m: int, itemsize: int):
    """Factor m == rows * lanes for the per-half flat data.

    Preference order:
      1. lanes a multiple of 128 (unmasked vst) with rows a multiple of the
         sublane height (full-height vregs),
      2. lanes a multiple of 128 (largest such divisor),
      3. largest divisor of m <= _MAX_LANES (lane dim == full array dim, so the
         block stays legal; only the last vreg per row is a masked store).
    """
    row_align = max(8, 32 // itemsize)
    top = min(_MAX_LANES, (m // 128) * 128)
    aligned = [L for L in range(top, 127, -128) if m % L == 0]
    for L in aligned:                       # largest lane width with aligned rows
        if (m // L) % row_align == 0:
            return m // L, L
    if aligned:                             # lane-dense, short rows
        return m // aligned[0], aligned[0]
    if m <= _MAX_LANES:
        return 1, m
    for L in range(_MAX_LANES, 0, -1):
        if m % L == 0:
            return m // L, L
    return 1, m                             # unreachable (L=1 always divides)


def _vmem_budget_bytes() -> int:
    """~75% of this generation's physical VMEM (v5e/v6e 128 MiB, v7x 64 MiB)."""
    try:
        phys = int(pltpu.get_tpu_info().vmem_capacity_bytes)
    except Exception:
        phys = 64 << 20          # conservative default: v7x per-core physical
    return max(32 << 20, (phys * 3) // 4)


def _groupsort2_kernel(x_ref, o_ref):
    # x_ref / o_ref: (1, 2, t_rows, lanes) VMEM tiles; dim 1 indexes the two
    # channel halves (== torch.chunk(2, dim=1)). max -> half 0, min -> half 1.
    a = x_ref[:, 0, :, :]
    b = x_ref[:, 1, :, :]
    o_ref[:, 0, :, :] = jnp.maximum(a, b)
    o_ref[:, 1, :, :] = jnp.minimum(a, b)


def group_sort(x: jax.Array, group_size: int = 2, *, donate_input: bool = False) -> jax.Array:
    """GroupSort activation. x: [N, C, *spatial] (NCHW-style)."""
    if group_size != 2:
        # TODO(synk): general group_size path (view + sort along the small
        # group axis) is not implemented as a Pallas kernel; only the module's
        # default group_size=2 fast path is.
        raise NotImplementedError("Only group_size=2 is implemented in Pallas.")

    orig_shape = x.shape
    n, c = orig_shape[0], orig_shape[1]
    if c % 2 != 0:
        raise ValueError(f"num_features ({c}) must be divisible by group_size=2")
    spatial = 1
    for d in orig_shape[2:]:
        spatial *= d
    m = (c // 2) * spatial                      # elements per channel-half
    itemsize = x.dtype.itemsize
    row_align = max(8, 32 // itemsize)          # 8 f32, 16 bf16, 32 int8/fp8

    rows, lanes = _pick_rows_lanes(m, itemsize)

    # Sublane-aligned row tile sized to the (per-generation) VMEM budget.
    vmem_budget = _vmem_budget_bytes()
    block_budget = min(_MAX_BLOCK_BYTES, vmem_budget // 4)
    rows_cap = max(row_align, block_budget // (2 * lanes * itemsize))
    t_rows = _largest_divisor(rows, row_align, rows_cap)
    if t_rows == 0:
        t_rows = rows                           # full dim is always legal

    # v7x shards "parallel" grid axes across its 2 TensorCores; for batch-1
    # launches split the row axis so the grid still has >= 2 steps.
    if n < 2 and rows // t_rows < 2:
        cap2 = rows // 2
        t2 = _largest_divisor(rows, row_align, cap2) if cap2 >= row_align else 0
        if t2 > 0:
            t_rows = t2

    x4 = x.reshape(n, 2, rows, lanes)           # pure view, no data movement
    block_bytes = 2 * t_rows * lanes * itemsize
    vmem_limit = int(min(vmem_budget, max(4 << 20, 6 * block_bytes)))

    total_elems = n * c * spatial
    cost = pl.CostEstimate(
        flops=total_elems,
        transcendentals=0,
        bytes_accessed=2 * total_elems * itemsize,
    )

    # NOTE: if xprof shows exposed DMA gaps on v7x, pipeline_mode=pl.Buffered(3)
    # on the input spec fits within the tightened VMEM budget above.
    out4 = pl.pallas_call(
        _groupsort2_kernel,
        out_shape=jax.ShapeDtypeStruct((n, 2, rows, lanes), x.dtype),
        grid_spec=pltpu.PrefetchScalarGridSpec(
            num_scalar_prefetch=0,
            grid=(n, rows // t_rows),
            in_specs=[
                pl.BlockSpec((1, 2, t_rows, lanes), lambda i, r: (i, 0, r, 0)),
            ],
            out_specs=pl.BlockSpec((1, 2, t_rows, lanes), lambda i, r: (i, 0, r, 0)),
        ),
        compiler_params=pltpu.CompilerParams(
            dimension_semantics=("parallel", "parallel"),
            vmem_limit_bytes=vmem_limit,
        ),
        cost_estimate=cost,
        input_output_aliases=({0: 0} if donate_input else {}),
    )(x4)

    return out4.reshape(orig_shape)


def _reference_group_sort2(x: jax.Array) -> jax.Array:
    c = x.shape[1]
    a, b = x[:, : c // 2], x[:, c // 2:]
    return jnp.concatenate([jnp.maximum(a, b), jnp.minimum(a, b)], axis=1)


if __name__ == "__main__":
    key = jax.random.PRNGKey(0)

    # Main case: lane-dense zero-copy path.
    x = jax.random.normal(key, (2, 4, 16, 16), dtype=jnp.float32)
    out = jax.block_until_ready(group_sort(x, group_size=2))
    ref = _reference_group_sort2(x)
    assert out.shape == x.shape and out.dtype == x.dtype
    assert jnp.allclose(out, ref), "Pallas GroupSort mismatch vs reference"

    # Ragged spatial case (7x7): exercises the largest-divisor lane path.
    k2 = jax.random.PRNGKey(1)
    x2 = jax.random.normal(k2, (1, 8, 7, 7), dtype=jnp.float32)
    out2 = jax.block_until_ready(group_sort(x2, group_size=2))
    assert jnp.allclose(out2, _reference_group_sort2(x2)), "ragged-path mismatch"

    print("KERNEL_OK")
</pallas_src>

<mosaic_0001>
module attributes {stable_mosaic.version = 11 : i64} {
  func.func @_groupsort2_kernel(%arg0: i32, %arg1: i32, %arg2: memref<1x2x1x512xf32, #tpu.memory_space<vmem>>, %arg3: memref<1x2x1x512xf32, #tpu.memory_space<vmem>>) attributes {dimension_semantics = [#tpu.dimension_semantics<parallel>, #tpu.dimension_semantics<parallel>], iteration_bounds = array<i64: 2, 1>, scalar_prefetch = 0 : i64, scratch_operands = 0 : i64, tpu.core_type = #tpu.core_type<tc>, window_params = [{transform_indices = @transform_0, window_bounds = array<i64: 1, 2, 1, 512>}, {transform_indices = @transform_1, window_bounds = array<i64: 1, 2, 1, 512>}]} {
    %c0 = arith.constant 0 : index
    %c0_0 = arith.constant 0 : index
    %c0_1 = arith.constant 0 : index
    %c0_2 = arith.constant 0 : index
    %0 = vector.load %arg2[%c0, %c0_0, %c0_1, %c0_2] : memref<1x2x1x512xf32, #tpu.memory_space<vmem>>, vector<1x1x1x512xf32>
    %1 = vector.shape_cast %0 : vector<1x1x1x512xf32> to vector<1x1x512xf32>
    %c0_3 = arith.constant 0 : index
    %c1 = arith.constant 1 : index
    %c0_4 = arith.constant 0 : index
    %c0_5 = arith.constant 0 : index
    %2 = vector.load %arg2[%c0_3, %c1, %c0_4, %c0_5] : memref<1x2x1x512xf32, #tpu.memory_space<vmem>>, vector<1x1x1x512xf32>
    %3 = vector.shape_cast %2 : vector<1x1x1x512xf32> to vector<1x1x512xf32>
    %4 = arith.maximumf %1, %3 : vector<1x1x512xf32>
    %c0_6 = arith.constant 0 : index
    %c0_7 = arith.constant 0 : index
    %c0_8 = arith.constant 0 : index
    %c0_9 = arith.constant 0 : index
    %5 = vector.load %arg3[%c0_6, %c0_7, %c0_8, %c0_9] : memref<1x2x1x512xf32, #tpu.memory_space<vmem>>, vector<1x1x1x512xf32>
    %6 = vector.shape_cast %5 : vector<1x1x1x512xf32> to vector<1x1x512xf32>
    %7 = vector.shape_cast %4 : vector<1x1x512xf32> to vector<1x1x1x512xf32>
    tpu.vector_store %arg3[%c0_6, %c0_7, %c0_8, %c0_9], %7 {strides = array<i32>} : memref<1x2x1x512xf32, #tpu.memory_space<vmem>>, vector<1x1x1x512xf32>,
    %8 = arith.minimumf %1, %3 : vector<1x1x512xf32>
    %c0_10 = arith.constant 0 : index
    %c1_11 = arith.constant 1 : index
    %c0_12 = arith.constant 0 : index
    %c0_13 = arith.constant 0 : index
    %9 = vector.load %arg3[%c0_10, %c1_11, %c0_12, %c0_13] : memref<1x2x1x512xf32, #tpu.memory_space<vmem>>, vector<1x1x1x512xf32>
    %10 = vector.shape_cast %9 : vector<1x1x1x512xf32> to vector<1x1x512xf32>
    %11 = vector.shape_cast %8 : vector<1x1x512xf32> to vector<1x1x1x512xf32>
    tpu.vector_store %arg3[%c0_10, %c1_11, %c0_12, %c0_13], %11 {strides = array<i32>} : memref<1x2x1x512xf32, #tpu.memory_space<vmem>>, vector<1x1x1x512xf32>,
    return
  }
  func.func @transform_0(%arg0: i32, %arg1: i32) -> (i32, i32, i32, i32) {
    %c0_i32 = arith.constant 0 : i32
    %c0_i32_0 = arith.constant 0 : i32
    %c0_i32_1 = arith.constant 0 : i32
    return %arg0, %c0_i32, %arg1, %c0_i32_0 : i32, i32, i32, i32
  }
  func.func @transform_1(%arg0: i32, %arg1: i32) -> (i32, i32, i32, i32) {
    %c0_i32 = arith.constant 0 : i32
    %c0_i32_0 = arith.constant 0 : i32
    %c0_i32_1 = arith.constant 0 : i32
    return %arg0, %c0_i32, %arg1, %c0_i32_0 : i32, i32, i32, i32
  }
}

</mosaic_0001>

<llo_original>
// kernel: tpu_custom_call.1
$region0: #{tpu_custom_call.1}
  #allocation0 [shape = 'u32[]', space=smem, size = 0x4, offset = 0x4, fixed_abs, tag = 'smem constant byte address 0x4 - core index']
  #allocation1 [shape = 'u32[72,128]{1,0:T(1,128)}', space=vmem, size = 0x9000, scoped, tag = 'internal scratch']
  %s0 = inlined_call_operand.hbm [shape: f32[2,2,1,512], index: 0, kind: input, shape index: {}]
  %s1 = inlined_call_operand.hbm [shape: f32[2,2,1,512], index: 1, kind: output, shape index: {}]
  %s2 = sld [smem:[#allocation0]]
  $region41: #{tpu_custom_call.1} parent=0
    _
  %s4 = ssub.s32 1, %s2
  %s5 = scalar_select 0, %s4, %s2
  $region1: #{tpu_custom_call.1} parent=0
    #allocation2 [shape = 'u8[8192]{0}', space=vmem, size = 0x2000, scoped, tag = 'input window, operand 0']
    #allocation3 [shape = 's32[2]{0}', space=sflag, size = 0x8, scoped, tag = 'scoped memory for tpu_custom_call.1']
    #allocation4 [shape = 's32[2]{0}', space=sflag, size = 0x8, scoped, tag = 'scoped memory for tpu_custom_call.1']
    #allocation5 [shape = 'u8[8192]{0}', space=vmem, size = 0x2000, scoped, tag = 'output window, operand 0']
    %6 = vsyncpa [#allocation3], 0
    %s7 = scalar_lea.sflag [#allocation3], 1
    %8 = vsyncpa %s7, 0
    %9 = vsyncpa [#allocation4], 0
    %s10 = scalar_lea.sflag [#allocation4], 1
    %11 = vsyncpa %s10, 0
    loop: start=0, step=1, limit=4
    $region2: #{tpu_custom_call.1} parent=1 // loop_pre_header
      _
    $region3: #{tpu_custom_call.1} parent=1 // loop_header
      %s13 = sphi 0, %s17
      %p14 = scmp.ge.s32.totalorder %s13, 4
      %s20 = sphi 0, %s32
      %s21 = sphi 0, %s28
      %s22 = sphi 0, %s20
      %s23 = sphi 0, %s21
      %s24 = sphi 0, %s22
      %s25 = sphi 0, %s23
      %s37 = sphi 0, %s39
      %s40 = sphi 0, %s37
      %s41 = sphi 0, %s40
      %s57 = sphi 0, %s41
      %s65 = sphi 0, %s67
      %s68 = sphi 0, %s65
      %s69 = sphi 0, %s68
      %s85 = sphi 0, %s69
    $region4: #{tpu_custom_call.1} parent=1 // loop_header_branch
      %16 = sbr.rel (%p14) target = $region8
    $region5: #{tpu_custom_call.1} parent=1 // loop_body
      %s18 = ssub.s32 %s13, 1
      %s19 = ssub.s32 %s13, 2
      %s26 = sadd.s32 1, %s21
      %p27 = scmp.ge.s32.totalorder %s26, 1
      %s28 = scalar_select %p27, 0, %s26
      %s29 = sadd.s32 1, %s20
      %s30 = scalar_select %p27, %s29, %s20
      %p31 = scmp.ge.s32.totalorder %s30, 2
      %s32 = scalar_select %p31, 0, %s30
      %s33 = ssub.s32 %s20, %s32
      %s34 = ssub.s32 %s21, %s28
      %s35 = sor.u32 %s33, %s34
      %p36 = scmp.eq.s32.totalorder %s35, 0
      %s38 = sadd.s32 %s37, 1
      %s39 = scalar_select %p36, %s37, %s38
      %p42 = pneg %p36
      %p43 = scmp.eq.s32.totalorder %s13, 1
      %p44 = por %p42, %p43
      %p45 = scmp.ne.s32.totalorder %s37, %s40
      %p46 = scmp.eq.s32.totalorder %s13, 0
      %p47 = por %p45, %p46
      %p48 = scmp.ne.s32.totalorder %s37, %s40
      %p49 = scmp.eq.s32.totalorder %s18, 1
      %p50 = por %p48, %p49
      %p51 = scmp.ne.s32.totalorder %s40, %s41
      %p52 = scmp.eq.s32.totalorder %s18, 0
      %p53 = por %p51, %p52
      %p54 = scmp.ne.s32.totalorder %s40, %s41
      %p55 = scmp.eq.s32.totalorder %s19, 1
      %p56 = por %p54, %p55
      %p58 = scmp.ne.s32.totalorder %s41, %s57
      %p59 = scmp.eq.s32.totalorder %s19, 0
      %p60 = por %p58, %p59
      %s61 = ssub.s32 %s20, %s32
      %s62 = ssub.s32 %s21, %s28
      %s63 = sor.u32 %s61, %s62
      %p64 = scmp.eq.s32.totalorder %s63, 0
      %s66 = sadd.s32 %s65, 1
      %s67 = scalar_select %p64, %s65, %s66
      %p70 = pneg %p64
      %p71 = scmp.eq.s32.totalorder %s13, 1
      %p72 = por %p70, %p71
      %p73 = scmp.ne.s32.totalorder %s65, %s68
      %p74 = scmp.eq.s32.totalorder %s13, 0
      %p75 = por %p73, %p74
      %p76 = scmp.ne.s32.totalorder %s65, %s68
      %p77 = scmp.eq.s32.totalorder %s18, 1
      %p78 = por %p76, %p77
      %p79 = scmp.ne.s32.totalorder %s68, %s69
      %p80 = scmp.eq.s32.totalorder %s18, 0
      %p81 = por %p79, %p80
      %p82 = scmp.ne.s32.totalorder %s68, %s69
      %p83 = scmp.eq.s32.totalorder %s19, 1
      %p84 = por %p82, %p83
      %p86 = scmp.ne.s32.totalorder %s69, %s85
      %p87 = scmp.eq.s32.totalorder %s19, 0
      %p88 = por %p86, %p87
      %p89 = scmp.le.s32.totalorder 1, %s13
      %p90 = scmp.lt.s32.totalorder %s13, 3
      %p91 = pnand %p89, %p90
      %p92 = pneg %p91
      // Predicated region
      $region9: #{tpu_custom_call.1} parent=5 // pred_check
        _
      $region10: #{tpu_custom_call.1} parent=5 // pred_check_branch
        %94 = sbr.rel (%p91) target = $region12
      $region11: #{tpu_custom_call.1} parent=5 // pred_region
        %s95 = ssub.s32 %s13, 1
      $region12: #{tpu_custom_call.1} parent=5 // pred_fallthru
        _
      %p96 = scmp.lt.s32.totalorder %s13, 2
      // Predicated region
      $region13: #{tpu_custom_call.1} parent=5 // pred_check
        %p97 = pneg %p96
      $region14: #{tpu_custom_call.1} parent=5 // pred_check_branch
        %99 = sbr.rel (%p97) target = $region16
      $region15: #{tpu_custom_call.1} parent=5 // pred_region
        // Predicated region
        $region17: #{tpu_custom_call.1} parent=15 // pred_check
          %p100 = pneg %p47
        $region18: #{tpu_custom_call.1} parent=15 // pred_check_branch
          %102 = sbr.rel (%p100) target = $region20
        $region19: #{tpu_custom_call.1} parent=15 // pred_region
          %s103 = sand.u32 %s37, 1
          %s104 = scalar_lea.sflag [#allocation3], %s103
          %s105 = sand.u32 %s37, 1
          %s106 = smul.addr %s105, 8
          %s107 = scalar_lea.vmem [#allocation2], %s106
          %109 = vsyncadd %s104, 0
          %s110 = smul.addr %s21, 4
          %s111 = smul.addr %s20, 8
          %s112 = sadd.s32 %s110, %s111
          %s113 = scalar_lea.hbm %s0, %s112
          %s114 = sshll.u32 %s113, 4
          %s115 = int_to_ptr.hbm [resolvable:$true] %s114
          %s116 = sshll.u32 %s107, 4
          %s117 = int_to_ptr.vmem [resolvable:$true] %s116
          %122 = dma.hbm_to_vmem [thread:$0]  %s115, 128, %s117, %s104, 64, 64, 4
        $region20: #{tpu_custom_call.1} parent=15 // pred_fallthru
          _
      $region16: #{tpu_custom_call.1} parent=5 // pred_fallthru
        _
      %p123 = scmp.le.s32.totalorder 1, %s13
      %p124 = scmp.lt.s32.totalorder %s13, 3
      %p125 = pnand %p123, %p124
      %p126 = pneg %p125
      // Predicated region
      $region21: #{tpu_custom_call.1} parent=5 // pred_check
        _
      $region22: #{tpu_custom_call.1} parent=5 // pred_check_branch
        %128 = sbr.rel (%p125) target = $region24
      $region23: #{tpu_custom_call.1} parent=5 // pred_region
        %s129 = ssub.s32 %s13, 1
        %s130 = sand.u32 %s40, 1
        %s131 = scalar_lea.sflag [#allocation3], %s130
        %s132 = sand.u32 %s40, 1
        %s133 = smul.addr %s132, 8
        %s134 = scalar_lea.vmem [#allocation2], %s133
        // Predicated region
        $region25: #{tpu_custom_call.1} parent=23 // pred_check
          %p135 = pneg %p53
        $region26: #{tpu_custom_call.1} parent=23 // pred_check_branch
          %137 = sbr.rel (%p135) target = $region28
        $region27: #{tpu_custom_call.1} parent=23 // pred_region
          %139 = dma.done %s131, 128
        $region28: #{tpu_custom_call.1} parent=23 // pred_fallthru
          _
        %s140 = sand.u32 %s40, 1
        %s141 = scalar_lea.sflag [#allocation3], %s140
        %s142 = sand.u32 %s40, 1
        %s143 = smul.addr %s142, 8
        %s144 = scalar_lea.vmem [#allocation2], %s143
        %p145 = pneg %p53
        %p146 = pneg %p50
        %p147 = pneg %p81
        %p148 = pneg %p78
        %s149 = sand.u32 %s68, 1
        %s150 = scalar_lea.sflag [#allocation4], %s149
        %s151 = sand.u32 %s68, 1
        %s152 = smul.addr %s151, 8
        %s153 = scalar_lea.vmem [#allocation5], %s152
        %v154 = vld [vmem:[%s134] sm:$0xf]
        %s155 = scalar_lea.vmem %s134, 4 [#allocation2]
        %v156 = vld [vmem:[%s155] sm:$0xf]
        %v157 = vmax.f32 %v154, %v156
        %v158 = vlaneseq
        %vm159 = vcmp.ge.s32.totalorder %v158, 0
        %vm160 = vcmp.lt.s32.totalorder %v158, 512
        %vm161 = vmand %vm159, %vm160
        %162 = vst.msk [vmem:[%s153] sm:$0xf] %vm161, %v157
        %v163 = vmin.f32 %v154, %v156
        %s164 = scalar_lea.vmem %s153, 4 [#allocation5]
        %165 = vst.msk [vmem:[%s164] sm:$0xf] %vm161, %v163
        %s166 = sand.u32 %s68, 1
        %s167 = scalar_lea.sflag [#allocation4], %s166
        %s168 = sand.u32 %s68, 1
        %s169 = smul.addr %s168, 8
        %s170 = scalar_lea.vmem [#allocation5], %s169
        // Predicated region
        $region29: #{tpu_custom_call.1} parent=23 // pred_check
          %p171 = pneg %p78
        $region30: #{tpu_custom_call.1} parent=23 // pred_check_branch
          %173 = sbr.rel (%p171) target = $region32
        $region31: #{tpu_custom_call.1} parent=23 // pred_region
          %175 = vsyncadd %s167, 0
          %s176 = smul.addr %s23, 4
          %s177 = smul.addr %s22, 8
          %s178 = sadd.s32 %s176, %s177
          %s179 = scalar_lea.hbm %s1, %s178
          %s180 = sshll.u32 %s170, 4
          %s181 = int_to_ptr.vmem [resolvable:$true] %s180
          %s182 = sshll.u32 %s179, 4
          %s183 = int_to_ptr.hbm [resolvable:$true] %s182
          %188 = dma.vmem_to_hbm [thread:$0]  %s181, 128, %s183, %s167, 64, 64, 4
        $region32: #{tpu_custom_call.1} parent=23 // pred_fallthru
          _
      $region24: #{tpu_custom_call.1} parent=5 // pred_fallthru
        _
      %p189 = scmp.le.s32.totalorder 2, %s13
      // Predicated region
      $region33: #{tpu_custom_call.1} parent=5 // pred_check
        %p190 = pneg %p189
      $region34: #{tpu_custom_call.1} parent=5 // pred_check_branch
        %192 = sbr.rel (%p190) target = $region36
      $region35: #{tpu_custom_call.1} parent=5 // pred_region
        %s193 = ssub.s32 %s13, 2
        // Predicated region
        $region37: #{tpu_custom_call.1} parent=35 // pred_check
          %p194 = pneg %p84
        $region38: #{tpu_custom_call.1} parent=35 // pred_check_branch
          %196 = sbr.rel (%p194) target = $region40
        $region39: #{tpu_custom_call.1} parent=35 // pred_region
          %s197 = sand.u32 %s69, 1
          %s198 = scalar_lea.sflag [#allocation4], %s197
          %s199 = sand.u32 %s69, 1
          %s200 = smul.addr %s199, 8
          %s201 = scalar_lea.vmem [#allocation5], %s200
          %203 = dma.done %s198, 128
        $region40: #{tpu_custom_call.1} parent=35 // pred_fallthru
          _
      $region36: #{tpu_custom_call.1} parent=5 // pred_fallthru
        _
    $region6: #{tpu_custom_call.1} parent=1 // loop_footer
      %s17 = sadd.s32 1, %s13
    $region7: #{tpu_custom_call.1} parent=1 // loop_footer_branch
      %12 = sbr.rel target = $region3
    $region8: #{tpu_custom_call.1} parent=1 // loop_exit
      _
    %204 = vsyncpa [#allocation3], 1
    %s205 = scalar_lea.sflag [#allocation3], 1
    %206 = vsyncpa %s205, 1
    %207 = vsyncpa [#allocation4], 1
    %s208 = scalar_lea.sflag [#allocation4], 1
    %209 = vsyncpa %s208, 1

</llo_original>
